<compile_context>
chip_gen: v5e
topology: v5e:2x2
jax: 0.10.0
libtpu: 0.0.40
codegen_flags: <defaults>
</compile_context>

<pallas_src>
import jax
import jax.numpy as jnp
from jax.experimental import pallas as pl
from jax.experimental.pallas import tpu as pltpu

_LANE = 128
_SUBLANE = 8
_TARGET_TILE_BYTES = 4 << 20   # ~4 MiB input tile per grid step
_VMEM_HEADROOM = 2 << 20


def _intensity_kernel(n_ref, x_ref, o_ref):
    # n_ref: (TB, 1[, 1]) per-sample noise (already in x.dtype);
    # x_ref/o_ref: (TB, ...) data tile.  Pure mem-bound broadcast multiply.
    o_ref[...] = x_ref[...] * n_ref[...]


def _vmem_capacity_bytes():
    """Per-generation VMEM capacity; conservative 64 MiB (v7x) fallback."""
    try:
        cap = int(pltpu.get_tpu_info().vmem_capacity_bytes)
        if cap > 0:
            return cap
    except Exception:
        pass
    return 64 << 20


def intensity(x, r, scale, *, min_pallas_bytes=1 << 20, donate_x=False):
    """x: (B, C, H, W) (any rank >= 2 works); r: (B,) standard-normal samples."""
    dims = x.shape
    B = dims[0]
    F = 1
    for d in dims[1:]:
        F *= d
    dtype_bytes = jnp.dtype(x.dtype).itemsize

    r = jnp.reshape(r, (B,)).astype(jnp.float32)
    noise = (1.0 + scale * jnp.clip(r, -2.0, 2.0)).astype(x.dtype)

    # Tiny tensors: a kernel launch costs more than an XLA-fused broadcast mul.
    if B * F * dtype_bytes < min_pallas_bytes:
        return x * noise.reshape((B,) + (1,) * (len(dims) - 1))

    # Tile budget: double-buffered input + output (~4x tile) + headroom must fit
    # the smallest-generation VMEM we might run on.
    vmem_cap = _vmem_capacity_bytes()
    tile_cap = min(_TARGET_TILE_BYTES,
                   max(512 << 10, (vmem_cap - _VMEM_HEADROOM) // 5))

    # --- Preferred: lane-dense (..., 128) view.  Try trailing products of the
    # non-batch dims until one is a multiple of 128.
    split = None
    trail = F
    for s in range(1, len(dims)):
        t = 1
        for d in dims[s:]:
            t *= d
        if t % _LANE == 0:
            split = s
            trail = t
            break

    if split is not None:
        lead = (B * F) // trail
        R = trail // _LANE
        x_view = x.reshape(lead, R, _LANE)
        n_view = jnp.repeat(noise, lead // B).reshape(lead, 1, 1)

        row_bytes = trail * dtype_bytes
        if row_bytes <= tile_cap:
            # Pack multiple whole rows per tile (leading dim: no (8,128) rule).
            TB = max(1, min(lead, tile_cap // row_bytes))
            TR = R
        else:
            # Large rows: one row per tile, split the feature axis in
            # sublane-aligned chunks; cdiv masks the ragged last block.
            TB = 1
            budget_rows = max(_SUBLANE,
                              (tile_cap // (_LANE * dtype_bytes)) // _SUBLANE * _SUBLANE)
            TR = min(R, budget_rows)     # multiple of 8, or full R

        grid = (pl.cdiv(lead, TB), pl.cdiv(R, TR))
        in_specs = [
            pl.BlockSpec((TB, 1, 1), lambda b, f: (b, 0, 0)),
            pl.BlockSpec((TB, TR, _LANE), lambda b, f: (b, f, 0)),
        ]
        out_spec = pl.BlockSpec((TB, TR, _LANE), lambda b, f: (b, f, 0))
        out_shape = jax.ShapeDtypeStruct((lead, R, _LANE), x.dtype)
        tile_bytes = TB * TR * _LANE * dtype_bytes
    else:
        # TODO(synk): no trailing product is a multiple of 128; fall back to a
        # (B, F) view.  Interior column blocks are still lane-dense (TF % 128
        # == 0); only the ragged last column block uses masked stores.
        x_view = x.reshape(B, F)
        n_view = noise.reshape(B, 1)
        row_bytes = F * dtype_bytes

        if B * row_bytes <= tile_cap or B < _SUBLANE:
            TB = B                                   # full batch dim: always legal
        else:
            TB = max(_SUBLANE,
                     min(B, max(1, tile_cap // row_bytes)) // _SUBLANE * _SUBLANE)

        per_row_budget_elems = max(_LANE, tile_cap // (TB * dtype_bytes))
        if F >= _LANE:
            TF = max(_LANE, min((F // _LANE) * _LANE,
                                (per_row_budget_elems // _LANE) * _LANE))
        else:
            TF = F                                   # full last dim: always legal

        grid = (pl.cdiv(B, TB), pl.cdiv(F, TF))
        in_specs = [
            pl.BlockSpec((TB, 1), lambda b, f: (b, 0)),
            pl.BlockSpec((TB, TF), lambda b, f: (b, f)),
        ]
        out_spec = pl.BlockSpec((TB, TF), lambda b, f: (b, f))
        out_shape = jax.ShapeDtypeStruct((B, F), x.dtype)
        tile_bytes = TB * TF * dtype_bytes

    # Double-buffered input + output plus headroom; never exceed the hardware.
    vmem_needed = 4 * tile_bytes + _VMEM_HEADROOM
    vmem_limit = int(min(max(vmem_needed, 32 << 20), vmem_cap))

    extra_kwargs = {}
    if donate_x:
        extra_kwargs["input_output_aliases"] = {1: 0}   # x_view is input index 1

    out = pl.pallas_call(
        _intensity_kernel,
        out_shape=out_shape,
        grid=grid,
        in_specs=in_specs,
        out_specs=out_spec,
        compiler_params=pltpu.CompilerParams(
            dimension_semantics=("parallel", "parallel"),
            vmem_limit_bytes=vmem_limit,
        ),
        **extra_kwargs,
    )(n_view, x_view)

    return out.reshape(dims)


def intensity_module(x, key, scale, **kw):
    """Mirrors Intensity.forward: draws the per-sample normal like torch.randn."""
    r = jax.random.normal(key, (x.shape[0],), dtype=jnp.float32)
    return intensity(x, r, scale, **kw)


if __name__ == "__main__":
    key = jax.random.PRNGKey(0)
    kx, kr = jax.random.split(key)

    B, C, H, W = 2, 4, 16, 16
    scale = 0.05

    x = jax.random.normal(kx, (B, C, H, W), dtype=jnp.float32)
    # Equivalent of torch.randn((B, 1, 1, 1)) -- the per-sample normal draw.
    r = jax.random.normal(kr, (B,), dtype=jnp.float32)

    # Force the Pallas path even at this tiny demo size.
    out = intensity(x, r, scale, min_pallas_bytes=0)
    jax.block_until_ready(out)

    # Pure-JAX reference check (same semantics as the PyTorch module).
    noise = 1.0 + scale * jnp.clip(r, -2.0, 2.0)
    ref = x * noise[:, None, None, None]
    assert jnp.allclose(out, ref, atol=1e-6, rtol=1e-6), "mismatch vs reference"

    print("KERNEL_OK")
</pallas_src>

<mosaic_0001>
module attributes {stable_mosaic.version = 11 : i64} {
  func.func @_intensity_kernel(%arg0: i32, %arg1: i32, %arg2: memref<2x1x1xf32, #tpu.memory_space<vmem>>, %arg3: memref<2x8x128xf32, #tpu.memory_space<vmem>>, %arg4: memref<2x8x128xf32, #tpu.memory_space<vmem>>) attributes {dimension_semantics = [#tpu.dimension_semantics<parallel>, #tpu.dimension_semantics<parallel>], iteration_bounds = array<i64: 1, 1>, scalar_prefetch = 0 : i64, scratch_operands = 0 : i64, tpu.core_type = #tpu.core_type<tc>, window_params = [{transform_indices = @transform_0, window_bounds = array<i64: 2, 1, 1>}, {transform_indices = @transform_1, window_bounds = array<i64: 2, 8, 128>}, {transform_indices = @transform_2, window_bounds = array<i64: 2, 8, 128>}]} {
    %c0 = arith.constant 0 : index
    %c0_0 = arith.constant 0 : index
    %c0_1 = arith.constant 0 : index
    %0 = vector.load %arg3[%c0, %c0_0, %c0_1] : memref<2x8x128xf32, #tpu.memory_space<vmem>>, vector<2x8x128xf32>
    %c0_2 = arith.constant 0 : index
    %c0_3 = arith.constant 0 : index
    %c0_4 = arith.constant 0 : index
    %1 = vector.load %arg2[%c0_2, %c0_3, %c0_4] : memref<2x1x1xf32, #tpu.memory_space<vmem>>, vector<2x1x1xf32>
    %2 = vector.broadcast %1 : vector<2x1x1xf32> to vector<2x8x128xf32>
    %3 = arith.mulf %0, %2 : vector<2x8x128xf32>
    %c0_5 = arith.constant 0 : index
    %c0_6 = arith.constant 0 : index
    %c0_7 = arith.constant 0 : index
    %4 = vector.load %arg4[%c0_5, %c0_6, %c0_7] : memref<2x8x128xf32, #tpu.memory_space<vmem>>, vector<2x8x128xf32>
    tpu.vector_store %arg4[%c0_5, %c0_6, %c0_7], %3 {strides = array<i32>} : memref<2x8x128xf32, #tpu.memory_space<vmem>>, vector<2x8x128xf32>,
    return
  }
  func.func @transform_0(%arg0: i32, %arg1: i32) -> (i32, i32, i32) {
    %c0_i32 = arith.constant 0 : i32
    %c0_i32_0 = arith.constant 0 : i32
    %c0_i32_1 = arith.constant 0 : i32
    return %arg0, %c0_i32, %c0_i32_0 : i32, i32, i32
  }
  func.func @transform_1(%arg0: i32, %arg1: i32) -> (i32, i32, i32) {
    %c0_i32 = arith.constant 0 : i32
    %c0_i32_0 = arith.constant 0 : i32
    return %arg0, %arg1, %c0_i32 : i32, i32, i32
  }
  func.func @transform_2(%arg0: i32, %arg1: i32) -> (i32, i32, i32) {
    %c0_i32 = arith.constant 0 : i32
    %c0_i32_0 = arith.constant 0 : i32
    return %arg0, %arg1, %c0_i32 : i32, i32, i32
  }
}

</mosaic_0001>

<llo_original>
// kernel: tpu_custom_call.1
$region0: #{tpu_custom_call.1}
  #allocation0 [shape = 'u32[]', space=smem, size = 0x4, offset = 0x4, fixed_abs, tag = 'smem constant byte address 0x4 - core index']
  #allocation1 [shape = 'u32[72,128]{1,0:T(1,128)}', space=vmem, size = 0x9000, scoped, tag = 'internal scratch']
  %s0 = inlined_call_operand.vmem [shape: f32[2,1,1], index: 0, kind: input, shape index: {}]
  %s1 = inlined_call_operand.hbm [shape: f32[2,8,128], index: 1, kind: input, shape index: {}]
  %s2 = inlined_call_operand.hbm [shape: f32[2,8,128], index: 2, kind: output, shape index: {}]
  %s3 = sld [smem:[#allocation0]]
  $region22: #{tpu_custom_call.1} parent=0
    _
  %s5 = ssub.s32 1, %s3
  %s6 = scalar_select 0, %s5, %s3
  $region1: #{tpu_custom_call.1} parent=0
    #allocation2 [shape = 'u8[8192]{0}', space=vmem, size = 0x2000, scoped, tag = 'input window, operand 1, single buffered']
    #allocation3 [shape = 's32[1]{0}', space=sflag, size = 0x4, scoped, tag = 'scoped memory for tpu_custom_call.1']
    #allocation4 [shape = 's32[1]{0}', space=sflag, size = 0x4, scoped, tag = 'scoped memory for tpu_custom_call.1']
    #allocation5 [shape = 'u8[8192]{0}', space=vmem, size = 0x2000, scoped, tag = 'output window, operand 0, single buffered']
    %7 = vsyncpa [#allocation3], 0
    %8 = vsyncpa [#allocation4], 0
    // Predicated region
    $region2: #{tpu_custom_call.1} parent=1 // pred_check
      _
    $region3: #{tpu_custom_call.1} parent=1 // pred_check_branch
      %10 = sbr.rel (0) target = $region5
    $region4: #{tpu_custom_call.1} parent=1 // pred_region
      _
    $region5: #{tpu_custom_call.1} parent=1 // pred_fallthru
      _
    // Predicated region
    $region6: #{tpu_custom_call.1} parent=1 // pred_check
      _
    $region7: #{tpu_custom_call.1} parent=1 // pred_check_branch
      %12 = sbr.rel (0) target = $region9
    $region8: #{tpu_custom_call.1} parent=1 // pred_region
      %14 = vsyncadd [#allocation3], 0
      %s15 = sshll.u32 %s1, 4
      %s16 = int_to_ptr.hbm [resolvable:$true] %s15
      %s17 = sshll.u32 [#allocation2], 4
      %s18 = int_to_ptr.vmem [resolvable:$true] %s17
      %23 = dma.hbm_to_vmem [thread:$0]  %s16, 256, %s18, [#allocation3], 128, 128, 8
    $region9: #{tpu_custom_call.1} parent=1 // pred_fallthru
      _
    // Predicated region
    $region10: #{tpu_custom_call.1} parent=1 // pred_check
      _
    $region11: #{tpu_custom_call.1} parent=1 // pred_check_branch
      %25 = sbr.rel (0) target = $region13
    $region12: #{tpu_custom_call.1} parent=1 // pred_region
      %27 = dma.done [#allocation3], 256
    $region13: #{tpu_custom_call.1} parent=1 // pred_fallthru
      _
    %v28 = vld [vmem:[#allocation2] sm:$0xff]
    %v29 = vld [vmem:[#allocation2 + $0x8] sm:$0xff]
    %v30 = vld [vmem:[%s0] sm:$0x1]
    %v31 = vld [vmem:[%s0 + $0x1] sm:$0x1]
    %v34 = vperm.slane %v30, 0
    %v35 = vperm.slane %v31, 0
    %36 = vset.pattern.permute.xlu0 0
    %37 = vperm.xlu0 %36, %v34
    %v38 = vpop.permute.xlu0 %37
    %40 = vset.pattern.permute.xlu0 0
    %41 = vperm.xlu0 %40, %v35
    %v42 = vpop.permute.xlu0 %41
    %v44 = vmul.f32 %v28, %v38
    %v45 = vmul.f32 %v29, %v42
    %46 = vst [vmem:[#allocation5] sm:$0xff] %v44
    %47 = vst [vmem:[#allocation5 + $0x8] sm:$0xff] %v45
    // Predicated region
    $region14: #{tpu_custom_call.1} parent=1 // pred_check
      _
    $region15: #{tpu_custom_call.1} parent=1 // pred_check_branch
      %49 = sbr.rel (0) target = $region17
    $region16: #{tpu_custom_call.1} parent=1 // pred_region
      %51 = vsyncadd [#allocation4], 0
      %s52 = sshll.u32 [#allocation5], 4
      %s53 = int_to_ptr.vmem [resolvable:$true] %s52
      %s54 = sshll.u32 %s2, 4
      %s55 = int_to_ptr.hbm [resolvable:$true] %s54
      %60 = dma.vmem_to_hbm [thread:$0]  %s53, 256, %s55, [#allocation4], 128, 128, 8
    $region17: #{tpu_custom_call.1} parent=1 // pred_fallthru
      _
    // Predicated region
    $region18: #{tpu_custom_call.1} parent=1 // pred_check
      _
    $region19: #{tpu_custom_call.1} parent=1 // pred_check_branch
      %62 = sbr.rel (0) target = $region21
    $region20: #{tpu_custom_call.1} parent=1 // pred_region
      %64 = dma.done [#allocation4], 256
    $region21: #{tpu_custom_call.1} parent=1 // pred_fallthru
      _
    %65 = vsyncpa [#allocation3], 1
    %66 = vsyncpa [#allocation4], 1

</llo_original>
